<compile_context>
chip_gen: v5e
topology: v5e:2x2
jax: 0.10.0
libtpu: 0.0.40
codegen_flags: <defaults>
</compile_context>

<pallas_src>
import functools

import jax
import jax.numpy as jnp
from jax.experimental import pallas as pl
from jax.experimental.pallas import tpu as pltpu


# ----------------------------------------------------------------------------
# Fused Pallas kernel: GFL (graph filter + ReLU + NoPool/zero-pad) x L  +  MLP
# ----------------------------------------------------------------------------
def _vnn_fused_kernel(x_ref, spow_ref, slab_ref, o_ref, *,
                      B, N0, Ks, n_sel, n_mlp, meta):
    """Whole VNN forward on VMEM-resident data.

      x_ref    (B*N0, F0)            node signals, rows = b*N0 + n
      spow_ref ((Kmax-1)*B*N0, B*N0) stacked block-diagonal (S^T)^k, k=1..
      slab_ref (R, W)                packed parameter slab (see _pack_params)
      o_ref    (B*N0, F_out)         flat output (wrapper slices valid nodes)
    """
    BN = B * N0

    def load_param(i):
        off, r, c = meta[i]                         # static offsets, 8-aligned
        return slab_ref[off:off + r, :][:, :c]

    # node index of each row (rows are b*N0 + n)
    node_idx = jax.lax.broadcasted_iota(jnp.int32, (BN, 1), 0) % N0

    h = x_ref[...]                                   # (BN, F0)
    p = 0
    for l, K in enumerate(Ks):
        # Selection-GNN zero padding: layer-l input only has n_sel[l-1] valid
        # nodes per batch; zero the rest before shifting (l = 0 is full-size).
        if l > 0:
            h = jnp.where(node_idx < n_sel[l - 1], h, 0.0)
        taps = load_param(p)                         # (K*G, F)
        bias = load_param(p + 1)                     # (1, F)
        p += 2
        if K > 1:
            # All graph shifts in ONE independent matmul against the stacked
            # precomputed powers (no serial z <- S @ z chain).
            zz = jnp.dot(spow_ref[0:(K - 1) * BN, :], h,
                         preferred_element_type=jnp.float32)
            z_cat = jnp.concatenate(
                [h] + [zz[j * BN:(j + 1) * BN, :] for j in range(K - 1)],
                axis=1)                              # (BN, K*G), k-major
        else:
            z_cat = h
        # Single tap contraction over the concatenated (k, g) axis + bias.
        y = jnp.dot(z_cat, taps, preferred_element_type=jnp.float32) + bias
        h = jnp.maximum(y, 0.0)                      # fused ReLU (sigma)

    # Readout MLP (per node).  Computed on all BN rows (one sub-tile matmul);
    # rows with node >= n_sel[-1] carry garbage but are sliced off by the
    # wrapper and never reduced across rows.
    for _ in range(n_mlp):
        W = load_param(p)
        b = load_param(p + 1)
        p += 2
        h = jnp.dot(h, W, preferred_element_type=jnp.float32) + b
        h = jnp.maximum(h, 0.1 * h)                  # LeakyReLU(0.1)

    o_ref[...] = h                                   # one flat store


# ----------------------------------------------------------------------------
# Parameter packing: one slab, each array row-padded to a multiple of 8.
# ----------------------------------------------------------------------------
def _pack_params(gfl_params, mlp_params):
    arrays = []
    for taps, bias in gfl_params:
        K, G, F = taps.shape
        arrays.append(taps.reshape(K * G, F))        # k-major rows
        arrays.append(bias)                          # (1, F)
    for W, b in mlp_params:
        arrays.append(W)                             # (Fin, Fout)
        arrays.append(b)                             # (1, Fout)
    width = max(int(a.shape[1]) for a in arrays)
    blocks, meta, off = [], [], 0
    for a in arrays:
        r, c = int(a.shape[0]), int(a.shape[1])
        r_pad = -(-r // 8) * 8                       # sublane-aligned offsets
        blk = jnp.zeros((r_pad, width), jnp.float32).at[:r, :c].set(a)
        blocks.append(blk)
        meta.append((off, r, c))
        off += r_pad
    return jnp.concatenate(blocks, axis=0), tuple(meta)


# ----------------------------------------------------------------------------
# Wrapper: one pallas_call for the whole forward pass
# ----------------------------------------------------------------------------
def vnn_forward(x, params):
    """x: (batch, dimFeatures, numberNodes)  -- PyTorch convention."""
    S = params["S"]
    N0 = S.shape[0]
    B = x.shape[0]
    BN = B * N0
    n_sel = tuple(int(n) for n in params["nSelectedNodes"])
    Ks = tuple(int(t.shape[0]) for t, _ in params["gfl"])
    n_mlp = len(params["mlp"])
    f_out = int(params["mlp"][-1][0].shape[1])

    # (B, G, N) -> (B, N, G) -> (B*N, G): rows are b*N0 + n, features on lanes.
    x_rows = jnp.transpose(x, (0, 2, 1)).reshape(BN, -1)

    # Precomputed block-diagonal S^T powers: kron(I_B, (S^T)^k), k=1..Kmax-1,
    # stacked along rows so a layer with K taps uses the first (K-1)*BN rows.
    Kmax = max(Ks)
    eyeB = jnp.eye(B, dtype=S.dtype)
    pow_blocks, st_k = [], S.T
    for _ in range(Kmax - 1):
        pow_blocks.append(jnp.kron(eyeB, st_k))
        st_k = st_k @ S.T
    if pow_blocks:
        s_pows = jnp.concatenate(pow_blocks, axis=0)     # ((Kmax-1)*BN, BN)
    else:
        s_pows = jnp.zeros((8, BN), jnp.float32)         # never read

    slab, meta = _pack_params(params["gfl"], params["mlp"])

    kernel = functools.partial(_vnn_fused_kernel, B=B, N0=N0, Ks=Ks,
                               n_sel=n_sel, n_mlp=n_mlp, meta=meta)
    out_flat = pl.pallas_call(
        kernel,
        out_shape=jax.ShapeDtypeStruct((BN, f_out), jnp.float32),
        in_specs=[pl.BlockSpec(memory_space=pltpu.MemorySpace.VMEM)] * 3,
        out_specs=pl.BlockSpec(memory_space=pltpu.MemorySpace.VMEM),
    )(x_rows, s_pows, slab)
    # Node selection of the last layer: XLA-side reshape + slice (free).
    return out_flat.reshape(B, N0, f_out)[:, :n_sel[-1], :]


# ----------------------------------------------------------------------------
# Pure-JAX reference reproducing the torch (B, F, N) semantics exactly.
# ----------------------------------------------------------------------------
def reference_forward(x, params):
    S = params["S"]
    N0 = S.shape[0]
    hp = jax.lax.Precision.HIGHEST
    h = x                                    # (B, G, N)
    n_in = N0
    for l, (taps, bias) in enumerate(params["gfl"]):
        n_out = params["nSelectedNodes"][l]
        if n_in < N0:
            h = jnp.pad(h, ((0, 0), (0, 0), (0, N0 - n_in)))
        z = h
        y = jnp.einsum("bgn,gf->bfn", z, taps[0], precision=hp)
        for k in range(1, taps.shape[0]):
            z = jnp.einsum("bgm,mn->bgn", z, S, precision=hp)
            y = y + jnp.einsum("bgn,gf->bfn", z, taps[k], precision=hp)
        y = y + bias[0][None, :, None]
        y = jnp.maximum(y, 0.0)
        h = y[:, :, :n_in][:, :, :n_out]
        n_in = n_out
    h = jnp.transpose(h, (0, 2, 1))
    for (W, b) in params["mlp"]:
        h = jnp.einsum("mf,fg->mg", h.reshape(-1, h.shape[-1]), W,
                       precision=hp).reshape(h.shape[0], h.shape[1], -1) + b
        h = jnp.where(h >= 0.0, h, 0.1 * h)
    return h


# ----------------------------------------------------------------------------
if __name__ == "__main__":
    # Architecture hyper-parameters
    dimNodeSignals = [4, 16, 32]
    nFilterTaps = [3, 3]
    nSelectedNodes = [12, 8]
    dimLayersMLP = [32, 16, 8]
    N0 = 16
    B = 2

    key = jax.random.PRNGKey(0)
    k_gso, k_x, *k_w = jax.random.split(key, 2 + 2 * len(nFilterTaps)
                                        + 2 * (len(dimLayersMLP) - 1))

    # Deterministic symmetric GSO, scaled to keep powers well-behaved
    A = jax.random.normal(k_gso, (N0, N0), jnp.float32)
    S = (A + A.T) / (2.0 * N0)

    # Graph-filter parameters: taps (K, G, F) and bias (1, F)
    gfl_params = []
    for l in range(len(nFilterTaps)):
        G, F, K = dimNodeSignals[l], dimNodeSignals[l + 1], nFilterTaps[l]
        taps = 0.1 * jax.random.normal(k_w[2 * l], (K, G, F), jnp.float32)
        bias = 0.1 * jax.random.normal(k_w[2 * l + 1], (1, F), jnp.float32)
        gfl_params.append((taps, bias))

    # MLP parameters: W stored as (in, out) (i.e. torch weight transposed)
    mlp_params = []
    off = 2 * len(nFilterTaps)
    for l in range(len(dimLayersMLP) - 1):
        fin, fout = dimLayersMLP[l], dimLayersMLP[l + 1]
        W = 0.1 * jax.random.normal(k_w[off + 2 * l], (fin, fout), jnp.float32)
        b = 0.1 * jax.random.normal(k_w[off + 2 * l + 1], (1, fout), jnp.float32)
        mlp_params.append((W, b))

    params = {
        "S": S,
        "gfl": gfl_params,
        "mlp": mlp_params,
        "nSelectedNodes": nSelectedNodes,
    }

    # Input: batchSize x dimFeatures x numberNodes
    x = jax.random.normal(k_x, (B, dimNodeSignals[0], N0), jnp.float32)

    out = vnn_forward(x, params)
    out = jax.block_until_ready(out)

    ref = jax.block_until_ready(reference_forward(x, params))
    assert out.shape == (B, nSelectedNodes[-1], dimLayersMLP[-1]), out.shape
    assert jnp.allclose(out, ref, rtol=1e-2, atol=1e-3), \
        float(jnp.max(jnp.abs(out - ref)))

    print("KERNEL_OK")
</pallas_src>

<mosaic_0001>
module attributes {stable_mosaic.version = 11 : i64} {
  func.func @_vnn_fused_kernel(%arg0: memref<32x4xf32, #tpu.memory_space<vmem>>, %arg1: memref<64x32xf32, #tpu.memory_space<vmem>>, %arg2: memref<144x32xf32, #tpu.memory_space<vmem>>, %arg3: memref<32x8xf32, #tpu.memory_space<vmem>>) attributes {dimension_semantics = [], scalar_prefetch = 0 : i64, scratch_operands = 0 : i64, tpu.core_type = #tpu.core_type<tc>} {
    %0 = tpu.iota {dimensions = array<i32: 0>} : vector<32x1xi32>
    %c16_i32 = arith.constant 16 : i32
    %c0_i32 = arith.constant 0 : i32
    %1 = arith.cmpi eq, %c16_i32, %c0_i32 : i32
    %c1_i32 = arith.constant 1 : i32
    %2 = arith.select %1, %c1_i32, %c16_i32 : i32
    %3 = vector.broadcast %2 : i32 to vector<32x1xi32>
    %4 = arith.remsi %0, %3 : vector<32x1xi32>
    %c0_i32_0 = arith.constant 0 : i32
    %5 = vector.broadcast %c0_i32_0 : i32 to vector<32x1xi32>
    %6 = arith.cmpi ne, %4, %5 : vector<32x1xi32>
    %c0_i32_1 = arith.constant 0 : i32
    %7 = vector.broadcast %c0_i32_1 : i32 to vector<32x1xi32>
    %8 = arith.cmpi slt, %4, %7 : vector<32x1xi32>
    %c0_i32_2 = arith.constant 0 : i32
    %9 = arith.cmpi slt, %2, %c0_i32_2 : i32
    %10 = vector.broadcast %9 : i1 to vector<32x1xi1>
    %11 = vector.broadcast %10 : vector<32x1xi1> to vector<32x1xi1>
    %12 = arith.xori %8, %11 : vector<32x1xi1>
    %13 = arith.andi %12, %6 : vector<32x1xi1>
    %14 = vector.broadcast %2 : i32 to vector<32x1xi32>
    %15 = arith.addi %4, %14 : vector<32x1xi32>
    %16 = arith.select %13, %15, %4 : vector<32x1xi1>, vector<32x1xi32>
    %c0 = arith.constant 0 : index
    %c0_3 = arith.constant 0 : index
    %17 = vector.load %arg0[%c0, %c0_3] : memref<32x4xf32, #tpu.memory_space<vmem>>, vector<32x4xf32>
    %c0_4 = arith.constant 0 : index
    %c0_5 = arith.constant 0 : index
    %18 = vector.load %arg2[%c0_4, %c0_5] : memref<144x32xf32, #tpu.memory_space<vmem>>, vector<12x32xf32>
    %19 = vector.extract_strided_slice %18 {offsets = [0, 0], sizes = [12, 16], strides = [1, 1]} : vector<12x32xf32> to vector<12x16xf32>
    %c16 = arith.constant 16 : index
    %c0_6 = arith.constant 0 : index
    %20 = vector.load %arg2[%c16, %c0_6] : memref<144x32xf32, #tpu.memory_space<vmem>>, vector<1x32xf32>
    %21 = vector.extract_strided_slice %20 {offsets = [0, 0], sizes = [1, 16], strides = [1, 1]} : vector<1x32xf32> to vector<1x16xf32>
    %c0_7 = arith.constant 0 : index
    %c0_8 = arith.constant 0 : index
    %22 = vector.load %arg1[%c0_7, %c0_8] : memref<64x32xf32, #tpu.memory_space<vmem>>, vector<64x32xf32>
    %cst = arith.constant dense<0.000000e+00> : vector<64x4xf32>
    %23 = tpu.matmul %22, %17, %cst {dimension_numbers = #tpu.dot_dimension_numbers<[1], [0], [0], [1], [0, 0, 1, 1], [], []>} : vector<64x32xf32>, vector<32x4xf32>, vector<64x4xf32> -> vector<64x4xf32>
    %24 = vector.extract_strided_slice %23 {offsets = [0, 0], sizes = [32, 4], strides = [1, 1]} : vector<64x4xf32> to vector<32x4xf32>
    %25 = vector.extract_strided_slice %23 {offsets = [32, 0], sizes = [32, 4], strides = [1, 1]} : vector<64x4xf32> to vector<32x4xf32>
    %26 = tpu.concatenate %17, %24, %25 in 1 : vector<32x4xf32>, vector<32x4xf32>, vector<32x4xf32> -> vector<32x12xf32>
    %cst_9 = arith.constant dense<0.000000e+00> : vector<32x16xf32>
    %27 = tpu.matmul %26, %19, %cst_9 {dimension_numbers = #tpu.dot_dimension_numbers<[1], [0], [0], [1], [0, 0, 1, 1], [], []>} : vector<32x12xf32>, vector<12x16xf32>, vector<32x16xf32> -> vector<32x16xf32>
    %28 = vector.broadcast %21 : vector<1x16xf32> to vector<32x16xf32>
    %29 = arith.addf %27, %28 : vector<32x16xf32>
    %cst_10 = arith.constant 0.000000e+00 : f32
    %30 = vector.broadcast %cst_10 : f32 to vector<32x16xf32>
    %31 = arith.maximumf %29, %30 : vector<32x16xf32>
    %c12_i32 = arith.constant 12 : i32
    %32 = vector.broadcast %c12_i32 : i32 to vector<32x1xi32>
    %33 = arith.cmpi slt, %16, %32 : vector<32x1xi32>
    %cst_11 = arith.constant 0.000000e+00 : f32
    %34 = vector.shape_cast %33 : vector<32x1xi1> to vector<32x1xi1>
    %35 = vector.broadcast %34 : vector<32x1xi1> to vector<32x16xi1>
    %36 = vector.broadcast %cst_11 : f32 to vector<32x16xf32>
    %37 = arith.select %35, %31, %36 : vector<32x16xi1>, vector<32x16xf32>
    %c24 = arith.constant 24 : index
    %c0_12 = arith.constant 0 : index
    %38 = vector.load %arg2[%c24, %c0_12] : memref<144x32xf32, #tpu.memory_space<vmem>>, vector<48x32xf32>
    %c72 = arith.constant 72 : index
    %c0_13 = arith.constant 0 : index
    %39 = vector.load %arg2[%c72, %c0_13] : memref<144x32xf32, #tpu.memory_space<vmem>>, vector<1x32xf32>
    %c0_14 = arith.constant 0 : index
    %c0_15 = arith.constant 0 : index
    %40 = vector.load %arg1[%c0_14, %c0_15] : memref<64x32xf32, #tpu.memory_space<vmem>>, vector<64x32xf32>
    %cst_16 = arith.constant dense<0.000000e+00> : vector<64x16xf32>
    %41 = tpu.matmul %40, %37, %cst_16 {dimension_numbers = #tpu.dot_dimension_numbers<[1], [0], [0], [1], [0, 0, 1, 1], [], []>} : vector<64x32xf32>, vector<32x16xf32>, vector<64x16xf32> -> vector<64x16xf32>
    %42 = vector.extract_strided_slice %41 {offsets = [0, 0], sizes = [32, 16], strides = [1, 1]} : vector<64x16xf32> to vector<32x16xf32>
    %43 = vector.extract_strided_slice %41 {offsets = [32, 0], sizes = [32, 16], strides = [1, 1]} : vector<64x16xf32> to vector<32x16xf32>
    %44 = tpu.concatenate %37, %42, %43 in 1 : vector<32x16xf32>, vector<32x16xf32>, vector<32x16xf32> -> vector<32x48xf32>
    %cst_17 = arith.constant dense<0.000000e+00> : vector<32x32xf32>
    %45 = tpu.matmul %44, %38, %cst_17 {dimension_numbers = #tpu.dot_dimension_numbers<[1], [0], [0], [1], [0, 0, 1, 1], [], []>} : vector<32x48xf32>, vector<48x32xf32>, vector<32x32xf32> -> vector<32x32xf32>
    %46 = vector.broadcast %39 : vector<1x32xf32> to vector<32x32xf32>
    %47 = arith.addf %45, %46 : vector<32x32xf32>
    %cst_18 = arith.constant 0.000000e+00 : f32
    %48 = vector.broadcast %cst_18 : f32 to vector<32x32xf32>
    %49 = arith.maximumf %47, %48 : vector<32x32xf32>
    %c80 = arith.constant 80 : index
    %c0_19 = arith.constant 0 : index
    %50 = vector.load %arg2[%c80, %c0_19] : memref<144x32xf32, #tpu.memory_space<vmem>>, vector<32x32xf32>
    %51 = vector.extract_strided_slice %50 {offsets = [0, 0], sizes = [32, 16], strides = [1, 1]} : vector<32x32xf32> to vector<32x16xf32>
    %c112 = arith.constant 112 : index
    %c0_20 = arith.constant 0 : index
    %52 = vector.load %arg2[%c112, %c0_20] : memref<144x32xf32, #tpu.memory_space<vmem>>, vector<1x32xf32>
    %53 = vector.extract_strided_slice %52 {offsets = [0, 0], sizes = [1, 16], strides = [1, 1]} : vector<1x32xf32> to vector<1x16xf32>
    %cst_21 = arith.constant dense<0.000000e+00> : vector<32x16xf32>
    %54 = tpu.matmul %49, %51, %cst_21 {dimension_numbers = #tpu.dot_dimension_numbers<[1], [0], [0], [1], [0, 0, 1, 1], [], []>} : vector<32x32xf32>, vector<32x16xf32>, vector<32x16xf32> -> vector<32x16xf32>
    %55 = vector.broadcast %53 : vector<1x16xf32> to vector<32x16xf32>
    %56 = arith.addf %54, %55 : vector<32x16xf32>
    %cst_22 = arith.constant 1.000000e-01 : f32
    %57 = vector.broadcast %cst_22 : f32 to vector<32x16xf32>
    %58 = arith.mulf %57, %56 : vector<32x16xf32>
    %59 = arith.maximumf %56, %58 : vector<32x16xf32>
    %c120 = arith.constant 120 : index
    %c0_23 = arith.constant 0 : index
    %60 = vector.load %arg2[%c120, %c0_23] : memref<144x32xf32, #tpu.memory_space<vmem>>, vector<16x32xf32>
    %61 = vector.extract_strided_slice %60 {offsets = [0, 0], sizes = [16, 8], strides = [1, 1]} : vector<16x32xf32> to vector<16x8xf32>
    %c136 = arith.constant 136 : index
    %c0_24 = arith.constant 0 : index
    %62 = vector.load %arg2[%c136, %c0_24] : memref<144x32xf32, #tpu.memory_space<vmem>>, vector<1x32xf32>
    %63 = vector.extract_strided_slice %62 {offsets = [0, 0], sizes = [1, 8], strides = [1, 1]} : vector<1x32xf32> to vector<1x8xf32>
    %cst_25 = arith.constant dense<0.000000e+00> : vector<32x8xf32>
    %64 = tpu.matmul %59, %61, %cst_25 {dimension_numbers = #tpu.dot_dimension_numbers<[1], [0], [0], [1], [0, 0, 1, 1], [], []>} : vector<32x16xf32>, vector<16x8xf32>, vector<32x8xf32> -> vector<32x8xf32>
    %65 = vector.broadcast %63 : vector<1x8xf32> to vector<32x8xf32>
    %66 = arith.addf %64, %65 : vector<32x8xf32>
    %cst_26 = arith.constant 1.000000e-01 : f32
    %67 = vector.broadcast %cst_26 : f32 to vector<32x8xf32>
    %68 = arith.mulf %67, %66 : vector<32x8xf32>
    %69 = arith.maximumf %66, %68 : vector<32x8xf32>
    %c0_27 = arith.constant 0 : index
    %c0_28 = arith.constant 0 : index
    %70 = vector.load %arg3[%c0_27, %c0_28] : memref<32x8xf32, #tpu.memory_space<vmem>>, vector<32x8xf32>
    tpu.vector_store %arg3[%c0_27, %c0_28], %69 {strides = array<i32>} : memref<32x8xf32, #tpu.memory_space<vmem>>, vector<32x8xf32>,
    return
  }
}

</mosaic_0001>

<llo_original>
// kernel: tpu_custom_call.1
$region0: #{tpu_custom_call.1}
  #allocation0 [shape = 'u32[]', space=smem, size = 0x4, offset = 0x4, fixed_abs, tag = 'smem constant byte address 0x4 - core index']
  #allocation1 [shape = 'u32[72,128]{1,0:T(1,128)}', space=vmem, size = 0x9000, scoped, tag = 'internal scratch']
  %s0 = inlined_call_operand.vmem [shape: f32[32,4], index: 0, kind: input, shape index: {}]
  %s1 = inlined_call_operand.vmem [shape: f32[64,32], index: 1, kind: input, shape index: {}]
  %s2 = inlined_call_operand.vmem [shape: f32[144,32], index: 2, kind: input, shape index: {}]
  %s3 = inlined_call_operand.vmem [shape: f32[32,8], index: 3, kind: output, shape index: {}]
  %s4 = sld [smem:[#allocation0]]
  $region22: #{tpu_custom_call.1} parent=0
    _
  %s6 = ssub.s32 1, %s4
  %s7 = scalar_select 0, %s6, %s4
  // Predicated region
  $region2: #{tpu_custom_call.1} parent=0 // pred_check
    _
  $region3: #{tpu_custom_call.1} parent=0 // pred_check_branch
    %9 = sbr.rel (0) target = $region5
  $region4: #{tpu_custom_call.1} parent=0 // pred_region
    _
  $region5: #{tpu_custom_call.1} parent=0 // pred_fallthru
    _
  // Predicated region
  $region6: #{tpu_custom_call.1} parent=0 // pred_check
    _
  $region7: #{tpu_custom_call.1} parent=0 // pred_check_branch
    %11 = sbr.rel (0) target = $region9
  $region8: #{tpu_custom_call.1} parent=0 // pred_region
    _
  $region9: #{tpu_custom_call.1} parent=0 // pred_fallthru
    _
  // Predicated region
  $region10: #{tpu_custom_call.1} parent=0 // pred_check
    _
  $region11: #{tpu_custom_call.1} parent=0 // pred_check_branch
    %13 = sbr.rel (0) target = $region13
  $region12: #{tpu_custom_call.1} parent=0 // pred_region
    _
  $region13: #{tpu_custom_call.1} parent=0 // pred_fallthru
    _
  %v14 = vlaneseq
  %v15 = vshrl.u32 %v14, 7
  %v16 = vadd.s32 %v15, 8
  %v17 = vadd.s32 %v15, 16
  %v18 = vadd.s32 %v15, 24
  %vm19 = vcmp.lt.s32.totalorder %v15, 0
  %v20 = vsub.s32 0, %v15
  %v21 = vsel %vm19, %v20, %v15
  %v22 = vshrl.u32 %v21, 4
  %v23 = vand.u32 %v21, 15
  %v24 = vsub.s32 0, %v23
  %v25 = vsel %vm19, %v24, %v23
  %vm26 = vcmp.lt.s32.totalorder %v16, 0
  %v27 = vsub.s32 0, %v16
  %v28 = vsel %vm26, %v27, %v16
  %v29 = vshrl.u32 %v28, 4
  %v30 = vand.u32 %v28, 15
  %v31 = vsub.s32 0, %v30
  %v32 = vsel %vm26, %v31, %v30
  %vm33 = vcmp.lt.s32.totalorder %v17, 0
  %v34 = vsub.s32 0, %v17
  %v35 = vsel %vm33, %v34, %v17
  %v36 = vshrl.u32 %v35, 4
  %v37 = vand.u32 %v35, 15
  %v38 = vsub.s32 0, %v37
  %v39 = vsel %vm33, %v38, %v37
  %vm40 = vcmp.lt.s32.totalorder %v18, 0
  %v41 = vsub.s32 0, %v18
  %v42 = vsel %vm40, %v41, %v18
  %v43 = vshrl.u32 %v42, 4
  %v44 = vand.u32 %v42, 15
  %v45 = vsub.s32 0, %v44
  %v46 = vsel %vm40, %v45, %v44
  %vm47 = vcmp.ne.s32.totalorder %v25, 0
  %vm48 = vcmp.ne.s32.totalorder %v32, 0
  %vm49 = vcmp.ne.s32.totalorder %v39, 0
  %vm50 = vcmp.ne.s32.totalorder %v46, 0
  %vm51 = vcmp.lt.s32.totalorder %v25, 0
  %vm52 = vcmp.lt.s32.totalorder %v32, 0
  %vm53 = vcmp.lt.s32.totalorder %v39, 0
  %vm54 = vcmp.lt.s32.totalorder %v46, 0
  %vm55 = vmand %vm51, %vm47
  %vm56 = vmand %vm52, %vm48
  %vm57 = vmand %vm53, %vm49
  %vm58 = vmand %vm54, %vm50
  %v59 = vadd.s32 %v25, 16
  %v60 = vadd.s32 %v32, 16
  %v61 = vadd.s32 %v39, 16
  %v62 = vadd.s32 %v46, 16
  %v63 = vsel %vm55, %v59, %v25
  %v64 = vsel %vm56, %v60, %v32
  %v65 = vsel %vm57, %v61, %v39
  %v66 = vsel %vm58, %v62, %v46
  %v67 = vld [vmem:[%s0] sm:$0xff]
  %v68 = vld [vmem:[%s0 + $0x8] sm:$0xff]
  %v69 = vld [vmem:[%s0 + $0x10] sm:$0xff]
  %v70 = vld [vmem:[%s0 + $0x18] sm:$0xff]
  %v71 = vld [vmem:[%s2] sm:$0xff]
  %v72 = vld [vmem:[%s2 + $0x8] sm:$0xf]
  %v73 = vld [vmem:[%s2 + $0x10] sm:$0x1]
  %v74 = vld [vmem:[%s1] sm:$0xff]
  %v75 = vld [vmem:[%s1 + $0x8] sm:$0xff]
  %v76 = vld [vmem:[%s1 + $0x10] sm:$0xff]
  %v77 = vld [vmem:[%s1 + $0x18] sm:$0xff]
  %v78 = vld [vmem:[%s1 + $0x20] sm:$0xff]
  %v79 = vld [vmem:[%s1 + $0x28] sm:$0xff]
  %v80 = vld [vmem:[%s1 + $0x30] sm:$0xff]
  %v81 = vld [vmem:[%s1 + $0x38] sm:$0xff]
  %vm82 = vcmask 261120
  %v84 = vsel %vm82, %v74, 0
  %v87 = vsel %vm82, %v75, 0
  %v90 = vsel %vm82, %v76, 0
  %v93 = vsel %vm82, %v77, 0
  %v96 = vsel %vm82, %v78, 0
  %v99 = vsel %vm82, %v79, 0
  %v102 = vsel %vm82, %v80, 0
  %v105 = vsel %vm82, %v81, 0
  %107 = vmatpush.msra.mxu0 0.0
  %108 = vmatpush.msra.mxu0 0.0
  %109 = vmatpush.msra.mxu0 0.0
  %110 = vmatpush.msra.mxu0 0.0
  %111 = vmatpush.msra.mxu0 0.0
  %112 = vmatpush.msra.mxu0 0.0
  %113 = vmatpush.msra.mxu0 0.0
  %114 = vmatpush.msra.mxu0 0.0
  %115 = vmatpush.msra.mxu0 0.0
  %116 = vmatpush.msra.mxu0 0.0
  %117 = vmatpush.msra.mxu0 0.0
  %118 = vmatpush.msra.mxu0 0.0
  %119 = vmatpush.msra.mxu0 %v70
  %120 = vmatpush.msra.mxu0 %v69
  %121 = vmatpush.msra.mxu0 %v68
  %122 = vmatpush.msra.mxu0 %v67
  %123 = vmatmul.f32.gmra.mxu0 %v84
  %v124 = vpop.f32.mrf.mxu0
  %v125 = vadd.f32 0.0, %v124
  %126 = vmatmul.f32.gmra.mxu0 %v87
  %v127 = vpop.f32.mrf.mxu0
  %v128 = vadd.f32 0.0, %v127
  %129 = vmatmul.f32.gmra.mxu0 %v90
  %v130 = vpop.f32.mrf.mxu0
  %v131 = vadd.f32 0.0, %v130
  %132 = vmatmul.f32.gmra.mxu0 %v93
  %v133 = vpop.f32.mrf.mxu0
  %v134 = vadd.f32 0.0, %v133
  %135 = vmatmul.f32.gmra.mxu0 %v96
  %v136 = vpop.f32.mrf.mxu0
  %v137 = vadd.f32 0.0, %v136
  %138 = vmatmul.f32.gmra.mxu0 %v99
  %v139 = vpop.f32.mrf.mxu0
  %v140 = vadd.f32 0.0, %v139
  %141 = vmatmul.f32.gmra.mxu0 %v102
  %v142 = vpop.f32.mrf.mxu0
  %v143 = vadd.f32 0.0, %v142
  %144 = vmatmul.f32.gmra.mxu0 %v105
  %v145 = vpop.f32.mrf.mxu0
  %v146 = vadd.f32 0.0, %v145
  %147 = vdwg.mxu0
  %152 = vrot.lane.b32.xlu0 %v125, 4
  %v153 = vpop.permute.xlu0 %152
  %154 = vrot.lane.b32.xlu0 %v128, 4
  %v155 = vpop.permute.xlu0 %154
  %156 = vrot.lane.b32.xlu0 %v131, 4
  %v157 = vpop.permute.xlu0 %156
  %158 = vrot.lane.b32.xlu0 %v134, 4
  %v159 = vpop.permute.xlu0 %158
  %168 = vrot.lane.b32.xlu0 %v137, 8
  %v169 = vpop.permute.xlu0 %168
  %170 = vrot.lane.b32.xlu0 %v140, 8
  %v171 = vpop.permute.xlu0 %170
  %172 = vrot.lane.b32.xlu0 %v143, 8
  %v173 = vpop.permute.xlu0 %172
  %174 = vrot.lane.b32.xlu0 %v146, 8
  %v175 = vpop.permute.xlu0 %174
  %vm180 = vcmask 31744
  %v181 = vsel %vm180, %v67, %v153
  %v182 = vsel %vm180, %v68, %v155
  %v183 = vsel %vm180, %v69, %v157
  %v184 = vsel %vm180, %v70, %v159
  %vm185 = vcmask 64512
  %v186 = vsel %vm185, %v181, %v169
  %v187 = vsel %vm185, %v182, %v171
  %v188 = vsel %vm185, %v183, %v173
  %v189 = vsel %vm185, %v184, %v175
  %v190 = vperm.slane %v73, 0
  %vm191 = vcmask 97280
  %v193 = vsel %vm191, %v186, 0
  %v196 = vsel %vm191, %v187, 0
  %v199 = vsel %vm191, %v188, 0
  %v202 = vsel %vm191, %v189, 0
  %vm204 = vcmask 1043456
  %v206 = vsel %vm204, %v72, 0
  %208 = vmatpush.msra.mxu0 0.0
  %209 = vmatpush.msra.mxu0 0.0
  %210 = vmatpush.msra.mxu0 0.0
  %211 = vmatpush.msra.mxu0 0.0
  %212 = vmatpush.msra.mxu0 0.0
  %213 = vmatpush.msra.mxu0 0.0
  %214 = vmatpush.msra.mxu0 0.0
  %215 = vmatpush.msra.mxu0 0.0
  %216 = vmatpush.msra.mxu0 0.0
  %217 = vmatpush.msra.mxu0 0.0
  %218 = vmatpush.msra.mxu0 0.0
  %219 = vmatpush.msra.mxu0 0.0
  %220 = vmatpush.msra.mxu0 0.0
  %221 = vmatpush.msra.mxu0 0.0
  %222 = vmatpush.msra.mxu0 %v206
  %223 = vmatpush.msra.mxu0 %v71
  %224 = vmatmul.f32.gmra.mxu0 %v193
  %v225 = vpop.f32.mrf.mxu0
  %v226 = vadd.f32 %v190, %v225
  %227 = vmatmul.f32.gmra.mxu0 %v196
  %v228 = vpop.f32.mrf.mxu0
  %v229 = vadd.f32 %v190, %v228
  %230 = vmatmul.f32.gmra.mxu0 %v199
  %v231 = vpop.f32.mrf.mxu0
  %v232 = vadd.f32 %v190, %v231
  %233 = vmatmul.f32.gmra.mxu0 %v202
  %v234 = vpop.f32.mrf.mxu0
  %v235 = vadd.f32 %v190, %v234
  %236 = vdwg.mxu0
  %v237 = vmax.f32 %v226, 0.0
  %v238 = vmax.f32 %v229, 0.0
  %v239 = vmax.f32 %v232, 0.0
  %v240 = vmax.f32 %v235, 0.0
  %vm241 = vcmp.lt.s32.totalorder %v63, 12
  %vm242 = vcmp.lt.s32.totalorder %v64, 12
  %vm243 = vcmp.lt.s32.totalorder %v65, 12
  %vm244 = vcmp.lt.s32.totalorder %v66, 12
  %v245 = vsel %vm241, 1, 0
  %v246 = vsel %vm242, 1, 0
  %v247 = vsel %vm243, 1, 0
  %v248 = vsel %vm244, 1, 0
  %vm249 = vcmp.eq.s32.totalorder %v245, 1
  %vm250 = vcmp.eq.s32.totalorder %v246, 1
  %vm251 = vcmp.eq.s32.totalorder %v247, 1
  %vm252 = vcmp.eq.s32.totalorder %v248, 1
  %v253 = vsel %vm249, %v237, 0.0
  %v254 = vsel %vm250, %v238, 0.0
  %v255 = vsel %vm251, %v239, 0.0
  %v256 = vsel %vm252, %v240, 0.0
  %v257 = vld [vmem:[%s2 + $0x18] sm:$0xff]
  %v258 = vld [vmem:[%s2 + $0x20] sm:$0xff]
  %v259 = vld [vmem:[%s2 + $0x28] sm:$0xff]
  %v260 = vld [vmem:[%s2 + $0x30] sm:$0xff]
  %v261 = vld [vmem:[%s2 + $0x38] sm:$0xff]
  %v262 = vld [vmem:[%s2 + $0x40] sm:$0xff]
  %v263 = vld [vmem:[%s2 + $0x48] sm:$0x1]
  %264 = vmatpush.msra.mxu0 0.0
  %265 = vmatpush.msra.mxu0 0.0
  %266 = vmatpush.msra.mxu0 0.0
  %267 = vmatpush.msra.mxu0 0.0
  %268 = vmatpush.msra.mxu0 0.0
  %269 = vmatpush.msra.mxu0 0.0
  %270 = vmatpush.msra.mxu0 0.0
  %271 = vmatpush.msra.mxu0 0.0
  %272 = vmatpush.msra.mxu0 0.0
  %273 = vmatpush.msra.mxu0 0.0
  %274 = vmatpush.msra.mxu0 0.0
  %275 = vmatpush.msra.mxu0 0.0
  %276 = vmatpush.msra.mxu0 %v256
  %277 = vmatpush.msra.mxu0 %v255
  %278 = vmatpush.msra.mxu0 %v254
  %279 = vmatpush.msra.mxu0 %v253
  %280 = vmatmul.f32.gmra.mxu0 %v84
  %v281 = vpop.f32.mrf.mxu0
  %v282 = vadd.f32 0.0, %v281
  %283 = vmatmul.f32.gmra.mxu0 %v87
  %v284 = vpop.f32.mrf.mxu0
  %v285 = vadd.f32 0.0, %v284
  %286 = vmatmul.f32.gmra.mxu0 %v90
  %v287 = vpop.f32.mrf.mxu0
  %v288 = vadd.f32 0.0, %v287
  %289 = vmatmul.f32.gmra.mxu0 %v93
  %v290 = vpop.f32.mrf.mxu0
  %v291 = vadd.f32 0.0, %v290
  %292 = vmatmul.f32.gmra.mxu0 %v96
  %v293 = vpop.f32.mrf.mxu0
  %v294 = vadd.f32 0.0, %v293
  %295 = vmatmul.f32.gmra.mxu0 %v99
  %v296 = vpop.f32.mrf.mxu0
  %v297 = vadd.f32 0.0, %v296
  %298 = vmatmul.f32.gmra.mxu0 %v102
  %v299 = vpop.f32.mrf.mxu0
  %v300 = vadd.f32 0.0, %v299
  %301 = vmatmul.f32.gmra.mxu0 %v105
  %v302 = vpop.f32.mrf.mxu0
  %v303 = vadd.f32 0.0, %v302
  %304 = vdwg.mxu0
  %309 = vrot.lane.b32.xlu0 %v282, 16
  %v310 = vpop.permute.xlu0 %309
  %311 = vrot.lane.b32.xlu0 %v285, 16
  %v312 = vpop.permute.xlu0 %311
  %313 = vrot.lane.b32.xlu0 %v288, 16
  %v314 = vpop.permute.xlu0 %313
  %315 = vrot.lane.b32.xlu0 %v291, 16
  %v316 = vpop.permute.xlu0 %315
  %325 = vrot.lane.b32.xlu0 %v294, 32
  %v326 = vpop.permute.xlu0 %325
  %327 = vrot.lane.b32.xlu0 %v297, 32
  %v328 = vpop.permute.xlu0 %327
  %329 = vrot.lane.b32.xlu0 %v300, 32
  %v330 = vpop.permute.xlu0 %329
  %331 = vrot.lane.b32.xlu0 %v303, 32
  %v332 = vpop.permute.xlu0 %331
  %vm337 = vcmask 130048
  %v338 = vsel %vm337, %v253, %v310
  %v339 = vsel %vm337, %v254, %v312
  %v340 = vsel %vm337, %v255, %v314
  %v341 = vsel %vm337, %v256, %v316
  %v342 = vsel %vm82, %v338, %v326
  %v343 = vsel %vm82, %v339, %v328
  %v344 = vsel %vm82, %v340, %v330
  %v345 = vsel %vm82, %v341, %v332
  %v346 = vperm.slane %v263, 0
  %vm347 = vcmask 392192
  %v349 = vsel %vm347, %v342, 0
  %v352 = vsel %vm347, %v343, 0
  %v355 = vsel %vm347, %v344, 0
  %v358 = vsel %vm347, %v345, 0
  %360 = vmatpush.msra.mxu0 0.0
  %361 = vmatpush.msra.mxu0 0.0
  %362 = vmatpush.msra.mxu0 0.0
  %363 = vmatpush.msra.mxu0 0.0
  %364 = vmatpush.msra.mxu0 0.0
  %365 = vmatpush.msra.mxu0 0.0
  %366 = vmatpush.msra.mxu0 0.0
  %367 = vmatpush.msra.mxu0 0.0
  %368 = vmatpush.msra.mxu0 0.0
  %369 = vmatpush.msra.mxu0 0.0
  %370 = vmatpush.msra.mxu0 %v262
  %371 = vmatpush.msra.mxu0 %v261
  %372 = vmatpush.msra.mxu0 %v260
  %373 = vmatpush.msra.mxu0 %v259
  %374 = vmatpush.msra.mxu0 %v258
  %375 = vmatpush.msra.mxu0 %v257
  %376 = vmatmul.f32.gmra.mxu0 %v349
  %v377 = vpop.f32.mrf.mxu0
  %v378 = vadd.f32 %v346, %v377
  %379 = vmatmul.f32.gmra.mxu0 %v352
  %v380 = vpop.f32.mrf.mxu0
  %v381 = vadd.f32 %v346, %v380
  %382 = vmatmul.f32.gmra.mxu0 %v355
  %v383 = vpop.f32.mrf.mxu0
  %v384 = vadd.f32 %v346, %v383
  %385 = vmatmul.f32.gmra.mxu0 %v358
  %v386 = vpop.f32.mrf.mxu0
  %v387 = vadd.f32 %v346, %v386
  %388 = vdwg.mxu0
  %v389 = vmax.f32 %v378, 0.0
  %v390 = vmax.f32 %v381, 0.0
  %v391 = vmax.f32 %v384, 0.0
  %v392 = vmax.f32 %v387, 0.0
  %v393 = vld [vmem:[%s2 + $0x50] sm:$0xff]
  %v394 = vld [vmem:[%s2 + $0x58] sm:$0xff]
  %v395 = vld [vmem:[%s2 + $0x60] sm:$0xff]
  %v396 = vld [vmem:[%s2 + $0x68] sm:$0xff]
  %v397 = vld [vmem:[%s2 + $0x70] sm:$0x1]
  %v398 = vperm.slane %v397, 0
  %v400 = vsel %vm82, %v389, 0
  %v403 = vsel %vm82, %v390, 0
  %v406 = vsel %vm82, %v391, 0
  %v409 = vsel %vm82, %v392, 0
  %411 = vmatpush.msra.mxu0 0.0
  %412 = vmatpush.msra.mxu0 0.0
  %413 = vmatpush.msra.mxu0 0.0
  %414 = vmatpush.msra.mxu0 0.0
  %415 = vmatpush.msra.mxu0 0.0
  %416 = vmatpush.msra.mxu0 0.0
  %417 = vmatpush.msra.mxu0 0.0
  %418 = vmatpush.msra.mxu0 0.0
  %419 = vmatpush.msra.mxu0 0.0
  %420 = vmatpush.msra.mxu0 0.0
  %421 = vmatpush.msra.mxu0 0.0
  %422 = vmatpush.msra.mxu0 0.0
  %423 = vmatpush.msra.mxu0 %v396
  %424 = vmatpush.msra.mxu0 %v395
  %425 = vmatpush.msra.mxu0 %v394
  %426 = vmatpush.msra.mxu0 %v393
  %427 = vmatmul.f32.gmra.mxu0 %v400
  %v428 = vpop.f32.mrf.mxu0
  %v429 = vadd.f32 %v398, %v428
  %430 = vmatmul.f32.gmra.mxu0 %v403
  %v431 = vpop.f32.mrf.mxu0
  %v432 = vadd.f32 %v398, %v431
  %433 = vmatmul.f32.gmra.mxu0 %v406
  %v434 = vpop.f32.mrf.mxu0
  %v435 = vadd.f32 %v398, %v434
  %436 = vmatmul.f32.gmra.mxu0 %v409
  %v437 = vpop.f32.mrf.mxu0
  %v438 = vadd.f32 %v398, %v437
  %439 = vdwg.mxu0
  %v440 = vmul.f32 %v429, 0.1
  %v441 = vmul.f32 %v432, 0.1
  %v442 = vmul.f32 %v435, 0.1
  %v443 = vmul.f32 %v438, 0.1
  %v444 = vmax.f32 %v429, %v440
  %v445 = vmax.f32 %v432, %v441
  %v446 = vmax.f32 %v435, %v442
  %v447 = vmax.f32 %v438, %v443
  %v448 = vld [vmem:[%s2 + $0x78] sm:$0xff]
  %v449 = vld [vmem:[%s2 + $0x80] sm:$0xff]
  %v450 = vld [vmem:[%s2 + $0x88] sm:$0x1]
  %v451 = vperm.slane %v450, 0
  %v453 = vsel %vm337, %v444, 0
  %v456 = vsel %vm337, %v445, 0
  %v459 = vsel %vm337, %v446, 0
  %v462 = vsel %vm337, %v447, 0
  %464 = vmatpush.msra.mxu0 0.0
  %465 = vmatpush.msra.mxu0 0.0
  %466 = vmatpush.msra.mxu0 0.0
  %467 = vmatpush.msra.mxu0 0.0
  %468 = vmatpush.msra.mxu0 0.0
  %469 = vmatpush.msra.mxu0 0.0
  %470 = vmatpush.msra.mxu0 0.0
  %471 = vmatpush.msra.mxu0 0.0
  %472 = vmatpush.msra.mxu0 0.0
  %473 = vmatpush.msra.mxu0 0.0
  %474 = vmatpush.msra.mxu0 0.0
  %475 = vmatpush.msra.mxu0 0.0
  %476 = vmatpush.msra.mxu0 0.0
  %477 = vmatpush.msra.mxu0 0.0
  %478 = vmatpush.msra.mxu0 %v449
  %479 = vmatpush.msra.mxu0 %v448
  %480 = vmatmul.f32.gmra.mxu0 %v453
  %v481 = vpop.f32.mrf.mxu0
  %v482 = vadd.f32 %v451, %v481
  %483 = vmatmul.f32.gmra.mxu0 %v456
  %v484 = vpop.f32.mrf.mxu0
  %v485 = vadd.f32 %v451, %v484
  %486 = vmatmul.f32.gmra.mxu0 %v459
  %v487 = vpop.f32.mrf.mxu0
  %v488 = vadd.f32 %v451, %v487
  %489 = vmatmul.f32.gmra.mxu0 %v462
  %v490 = vpop.f32.mrf.mxu0
  %v491 = vadd.f32 %v451, %v490
  %492 = vdwg.mxu0
  %v493 = vmul.f32 %v482, 0.1
  %v494 = vmul.f32 %v485, 0.1
  %v495 = vmul.f32 %v488, 0.1
  %v496 = vmul.f32 %v491, 0.1
  %v497 = vmax.f32 %v482, %v493
  %v498 = vmax.f32 %v485, %v494
  %v499 = vmax.f32 %v488, %v495
  %v500 = vmax.f32 %v491, %v496
  %501 = vst.msk [vmem:[%s3] sm:$0xff] %vm185, %v497
  %502 = vst.msk [vmem:[%s3 + $0x8] sm:$0xff] %vm185, %v498
  %503 = vst.msk [vmem:[%s3 + $0x10] sm:$0xff] %vm185, %v499
  %504 = vst.msk [vmem:[%s3 + $0x18] sm:$0xff] %vm185, %v500
  // Predicated region
  $region14: #{tpu_custom_call.1} parent=0 // pred_check
    _
  $region15: #{tpu_custom_call.1} parent=0 // pred_check_branch
    %506 = sbr.rel (0) target = $region17
  $region16: #{tpu_custom_call.1} parent=0 // pred_region
    _
  $region17: #{tpu_custom_call.1} parent=0 // pred_fallthru
    _
  // Predicated region
  $region18: #{tpu_custom_call.1} parent=0 // pred_check
    _
  $region19: #{tpu_custom_call.1} parent=0 // pred_check_branch
    %508 = sbr.rel (0) target = $region21
  $region20: #{tpu_custom_call.1} parent=0 // pred_region
    _
  $region21: #{tpu_custom_call.1} parent=0 // pred_fallthru
    _

</llo_original>
